<compile_context>
chip_gen: v5e
topology: v5e:2x2
jax: 0.10.0
libtpu: 0.0.40
codegen_flags: <defaults>
</compile_context>

<pallas_src>
import functools

import jax
import jax.numpy as jnp
from jax import lax
from jax.experimental import pallas as pl
from jax.experimental.pallas import tpu as pltpu


def _encoder_fused_kernel(seed_ref, xg_ref, w1_ref, b1_ref, w2_ref, b2_ref,
                          w3_ref, b3_ref, w4_ref, b4_ref, o_ref,
                          *, Qg, L2, z_dim, n4p, p_drop, apply_dropout):
    """Fused 4-layer encoder for one batch block (grid axis 0 = batch blocks)."""
    Bb = xg_ref.shape[0]
    C16 = xg_ref.shape[2]          # 16 * Cin
    C4 = C16 // 4                  # 4 * Cin
    c1g = w1_ref.shape[1]          # 4 * c1 = 128

    if apply_dropout:
        # TODO(synk): on-chip PRNG cannot reproduce torch's RNG stream; masks are
        # decorrelated across grid steps via (seed, program_id) and the stateful
        # PRNG advances across the four per-layer draws (no reseeds).
        pltpu.prng_seed(seed_ref[0], pl.program_id(0))

    def dropout(v):
        if not apply_dropout:
            return v
        bits = pltpu.bitcast(pltpu.prng_random_bits(v.shape), jnp.uint32)
        thresh = jnp.uint32(min(int(p_drop * (2.0 ** 32)), 2 ** 32 - 1))
        return jnp.where(bits >= thresh, v * (1.0 / (1.0 - p_drop)), 0.0)

    # ---- Layer 1: Conv1d(Cin -> 32, k=8, s=4), computed straight into the
    #      phase-grouped layout (4 consecutive conv outputs per row, 128 lanes)
    #      with one matmul against a block-banded weight. -------------------
    xg = xg_ref[...]                                   # (Bb, Qg+1, 16*Cin)
    lo = xg[:, :Qg, :]                                 # x[16q .. 16q+15]
    hi = xg[:, 1:, :C4]                                # x[16q+16 .. 16q+19]
    xw = jnp.concatenate([lo, hi], axis=-1).reshape(Bb * Qg, C16 + C4)
    h1 = jnp.dot(xw, w1_ref[...], preferred_element_type=jnp.float32)
    h1 = dropout(jnp.maximum(h1 + b1_ref[...], 0.0))   # (Bb*Qg, 128)
    h1 = h1.reshape(Bb, Qg, c1g)

    # ---- Layer 2: Conv1d(32 -> 64, k=8, s=4).  Each output window is two
    #      contiguous rows of the phase-grouped h1 -> single K=256 matmul. ---
    h1cat = jnp.concatenate([h1[:, :L2, :], h1[:, 1:L2 + 1, :]], axis=-1)
    h1cat = h1cat.reshape(Bb * L2, 2 * c1g)            # (Bb*L2, 256)
    h2 = jnp.dot(h1cat, w2_ref[...], preferred_element_type=jnp.float32)
    h2 = dropout(jnp.maximum(h2 + b2_ref[...], 0.0))   # (Bb*L2, 64)

    # ---- Layers 3 & 4: 1x1 convs = pointwise matmuls over M = Bb*L2 rows. ---
    h3 = jnp.dot(h2, w3_ref[...], preferred_element_type=jnp.float32)
    h3 = dropout(jnp.maximum(h3 + b3_ref[...], 0.0))
    h4 = jnp.dot(h3, w4_ref[...], preferred_element_type=jnp.float32)
    h4 = jnp.maximum(h4 + b4_ref[...], 0.0)
    if apply_dropout:
        if z_dim < n4p:
            # Padded columns are exact zeros -> skip generating bits for them.
            kept = dropout(h4[:, :z_dim])
            h4 = jnp.concatenate(
                [kept, jnp.zeros((h4.shape[0], n4p - z_dim), h4.dtype)], axis=-1)
        else:
            h4 = dropout(h4)
    o_ref[...] = h4.reshape(Bb, L2, n4p).astype(o_ref.dtype)


class EncoderPallas:
    """Deterministic-parameter JAX/Pallas port of the PyTorch Encoder."""

    K = 8  # conv kernel size of layers 1-2

    def __init__(self, input_channels=3, z_dim=256, key=None):
        specs = [(32, input_channels, 8, 4),
                 (64, 32, 8, 4),
                 (128, 64, 1, 1),
                 (z_dim, 128, 1, 1)]
        self.z_dim = z_dim
        self.input_channels = input_channels
        self.strides = [s[3] for s in specs]
        key = jax.random.PRNGKey(0) if key is None else key
        self.raw_params = []
        for (cout, cin, k, _) in specs:
            key, sub = jax.random.split(key)
            fan_in = cin * k
            std = (2.0 / fan_in) ** 0.5       # kaiming_normal_ (fan_in, relu gain)
            w = (std * jax.random.normal(sub, (cout, cin, k))).astype(jnp.float32)
            bvec = jnp.zeros((cout,), dtype=jnp.float32)
            self.raw_params.append((w, bvec))

        # Matmul layouts hoisted to __init__: (Cout, Cin, K) -> (K*Cin, Cout),
        # row order (k, ci).
        def as_mat(w):
            cout, cin, k = w.shape
            return jnp.transpose(w, (2, 1, 0)).reshape(k * cin, cout)

        (w1, b1), (w2, b2), (w3, b3), (w4, b4) = self.raw_params
        C = input_channels
        c1 = w1.shape[0]
        self.c1 = c1
        # Block-banded layer-1 weight: one (20*Cin, 4*c1) matrix computes the 4
        # consecutive conv outputs (phases p=0..3) of a 20-sample input window.
        w1_mat = as_mat(w1)                              # (8*C, c1)
        cols = []
        for p in range(4):
            cols.append(jnp.concatenate([
                jnp.zeros((4 * p * C, c1), jnp.float32),
                w1_mat,
                jnp.zeros(((20 - 8 - 4 * p) * C, c1), jnp.float32)], axis=0))
        self.w1g = jnp.concatenate(cols, axis=1)         # (20*C, 4*c1 = 128)
        self.b1g = jnp.tile(b1, 4).reshape(1, 4 * c1)    # bias replicated per phase

        self.w2m, self.b2r = as_mat(w2), b2.reshape(1, -1)   # (256, 64)
        self.w3m, self.b3r = as_mat(w3), b3.reshape(1, -1)   # (64, 128)
        # Pad the only HBM-visible output channel dim to a multiple of 128 so the
        # out_spec is lane-dense; sliced back in __call__.
        self.n4p = max(128, ((z_dim + 127) // 128) * 128)
        w4m, b4r = as_mat(w4), b4.reshape(1, -1)
        if self.n4p != z_dim:
            w4m = jnp.pad(w4m, ((0, 0), (0, self.n4p - z_dim)))
            b4r = jnp.pad(b4r, ((0, 0), (0, self.n4p - z_dim)))
        self.w4m, self.b4r = w4m, b4r

    def __call__(self, x_ncl, training=False, seed=0):
        # x_ncl: (B, C, L) PyTorch layout; returns (B, z_dim, L_out).
        # TODO(synk): F.dropout in the reference defaults to training=True (always
        # stochastic); here dropout is opt-in via `training` so the forward is
        # deterministic for the correctness check.
        B, C, L = x_ncl.shape
        if C != self.input_channels:
            raise ValueError("channel mismatch")
        K = self.K
        if L < 36:
            raise ValueError("need L >= 36 for two stride-4 / kernel-8 convs")
        L1 = (L - K) // 4 + 1
        L2 = (L1 - K) // 4 + 1
        Qg = L2 + 1                      # groups of 4 layer-1 outputs (phase rows)
        c1 = self.c1
        c2 = self.w2m.shape[1]
        c3 = self.w3m.shape[1]
        n4p = self.n4p
        C16 = 16 * C

        # NCL -> NLC, trim/pad time to a whole number of 16-sample groups (+1
        # halo group), then group time by 16 (pure reshape; 16*C-lane input).
        x_nlc = jnp.transpose(x_ncl, (0, 2, 1))          # (B, L, C)
        Lpad = 16 * (Qg + 1)
        if L >= Lpad:
            x_use = x_nlc[:, :Lpad, :]
        else:
            x_use = jnp.pad(x_nlc, ((0, 0), (0, Lpad - L), (0, 0)))
        xg = x_use.reshape(B, Qg + 1, C16)               # (B, Qg+1, 16*C)

        # Batch blocking: raise matmul M (Bb*L2 / Bb*Qg rows), bound per-step
        # VMEM, and keep >= 2 parallel grid steps when B >= 2 (v7x megacore).
        per_batch_bytes = 4 * (2 * ((Qg + 1) * C16 + L2 * n4p)
                               + Qg * 4 * c1
                               + L2 * (8 * c1 + c2 + c3 + n4p))
        vmem_budget = 24 * 1024 * 1024
        bb_vmem = max(1, vmem_budget // max(per_batch_bytes, 1))
        bb_rows = max(1, -(-256 // max(L2, 1)))          # target ~256 M rows/step
        Bb = int(max(1, min(B, bb_vmem, bb_rows)))
        if B >= 2 and -(-B // Bb) < 2:
            Bb = max(1, (B + 1) // 2)
        G = -(-B // Bb)
        Bpad = G * Bb
        if Bpad != B:
            xg = jnp.pad(xg, ((0, Bpad - B), (0, 0), (0, 0)))

        kernel = functools.partial(
            _encoder_fused_kernel, Qg=Qg, L2=L2, z_dim=self.z_dim, n4p=n4p,
            p_drop=0.2, apply_dropout=bool(training))

        flops = 2 * Bpad * (Qg * (20 * C) * (4 * c1) + L2 * (8 * c1) * c2
                            + L2 * c2 * c3 + L2 * c3 * n4p)
        # Weights counted once (invariant index_maps fetch them a single time).
        bytes_accessed = 4 * (Bpad * (Qg + 1) * C16 + Bpad * L2 * n4p
                              + self.w1g.size + self.w2m.size + self.w3m.size
                              + self.w4m.size + 4 * c1 + c2 + c3 + n4p)

        grid_spec = pltpu.PrefetchScalarGridSpec(
            num_scalar_prefetch=1,                 # dropout seed lives in SMEM
            grid=(G,),
            in_specs=[
                pl.BlockSpec((Bb, Qg + 1, C16), lambda g, s: (g, 0, 0)),
                pl.BlockSpec((20 * C, 4 * c1), lambda g, s: (0, 0)),
                pl.BlockSpec((1, 4 * c1), lambda g, s: (0, 0)),
                pl.BlockSpec((8 * c1, c2), lambda g, s: (0, 0)),
                pl.BlockSpec((1, c2), lambda g, s: (0, 0)),
                pl.BlockSpec((c2, c3), lambda g, s: (0, 0)),
                pl.BlockSpec((1, c3), lambda g, s: (0, 0)),
                pl.BlockSpec((c3, n4p), lambda g, s: (0, 0)),
                pl.BlockSpec((1, n4p), lambda g, s: (0, 0)),
            ],
            out_specs=pl.BlockSpec((Bb, L2, n4p), lambda g, s: (g, 0, 0)),
        )

        # TODO(synk): for very long sequences a halo-aware time tile over L2 would
        # bound per-step VMEM further; batch-capping + vmem_limit_bytes suffices
        # for these shapes.
        out = pl.pallas_call(
            kernel,
            out_shape=jax.ShapeDtypeStruct((Bpad, L2, n4p), jnp.float32),
            grid_spec=grid_spec,
            compiler_params=pltpu.CompilerParams(
                dimension_semantics=("parallel",),
                vmem_limit_bytes=48 * 1024 * 1024),
            cost_estimate=pl.CostEstimate(
                flops=flops, transcendentals=0, bytes_accessed=bytes_accessed),
        )(jnp.asarray([seed], dtype=jnp.int32),
          xg, self.w1g, self.b1g, self.w2m, self.b2r,
          self.w3m, self.b3r, self.w4m, self.b4r)

        out = out[:B, :, :self.z_dim]
        return jnp.transpose(out, (0, 2, 1))             # (B, z_dim, L2)


def _reference_forward(enc, x_ncl):
    """Pure-JAX reference (lax.conv) for correctness checking, no dropout."""
    x = x_ncl
    for (w, b), stride in zip(enc.raw_params, enc.strides):
        x = lax.conv_general_dilated(
            x, w, window_strides=(stride,), padding="VALID",
            dimension_numbers=("NCH", "OIH", "NCH"))
        x = jnp.maximum(x + b[None, :, None], 0.0)
    return x


if __name__ == "__main__":
    B, C_IN, L, Z_DIM = 2, 3, 67, 128
    key = jax.random.PRNGKey(0)
    k_x, k_p = jax.random.split(key)
    x = jax.random.normal(k_x, (B, C_IN, L), dtype=jnp.float32)

    enc = EncoderPallas(input_channels=C_IN, z_dim=Z_DIM, key=k_p)

    out = jax.block_until_ready(enc(x, training=False))
    ref = jax.block_until_ready(_reference_forward(enc, x))

    assert out.shape == ref.shape, (out.shape, ref.shape)
    err = float(jnp.max(jnp.abs(out - ref)))
    assert jnp.allclose(out, ref, atol=1e-4, rtol=1e-4), err

    print("KERNEL_OK")
</pallas_src>

<mosaic_0001>
module attributes {stable_mosaic.version = 11 : i64} {
  func.func @_encoder_fused_kernel(%arg0: i32, %arg1: memref<1xi32, #tpu.memory_space<smem>>, %arg2: memref<1x4x48xf32, #tpu.memory_space<vmem>>, %arg3: memref<60x128xf32, #tpu.memory_space<vmem>>, %arg4: memref<1x128xf32, #tpu.memory_space<vmem>>, %arg5: memref<256x64xf32, #tpu.memory_space<vmem>>, %arg6: memref<1x64xf32, #tpu.memory_space<vmem>>, %arg7: memref<64x128xf32, #tpu.memory_space<vmem>>, %arg8: memref<1x128xf32, #tpu.memory_space<vmem>>, %arg9: memref<128x128xf32, #tpu.memory_space<vmem>>, %arg10: memref<1x128xf32, #tpu.memory_space<vmem>>, %arg11: memref<1x2x128xf32, #tpu.memory_space<vmem>>) attributes {dimension_semantics = [#tpu.dimension_semantics<parallel>], iteration_bounds = array<i64: 2>, scalar_prefetch = 1 : i64, scratch_operands = 0 : i64, tpu.core_type = #tpu.core_type<tc>, window_params = [{transform_indices = @transform_0, window_bounds = array<i64: 1, 4, 48>}, {pipeline_mode = #tpu.pipeline_mode<synchronous>, transform_indices = @transform_1, window_bounds = array<i64: 60, 128>}, {pipeline_mode = #tpu.pipeline_mode<synchronous>, transform_indices = @transform_2, window_bounds = array<i64: 1, 128>}, {pipeline_mode = #tpu.pipeline_mode<synchronous>, transform_indices = @transform_3, window_bounds = array<i64: 256, 64>}, {pipeline_mode = #tpu.pipeline_mode<synchronous>, transform_indices = @transform_4, window_bounds = array<i64: 1, 64>}, {pipeline_mode = #tpu.pipeline_mode<synchronous>, transform_indices = @transform_5, window_bounds = array<i64: 64, 128>}, {pipeline_mode = #tpu.pipeline_mode<synchronous>, transform_indices = @transform_6, window_bounds = array<i64: 1, 128>}, {pipeline_mode = #tpu.pipeline_mode<synchronous>, transform_indices = @transform_7, window_bounds = array<i64: 128, 128>}, {pipeline_mode = #tpu.pipeline_mode<synchronous>, transform_indices = @transform_8, window_bounds = array<i64: 1, 128>}, {transform_indices = @transform_9, window_bounds = array<i64: 1, 2, 128>}]} {
    %c0 = arith.constant 0 : index
    %c0_0 = arith.constant 0 : index
    %c0_1 = arith.constant 0 : index
    %0 = vector.load %arg2[%c0, %c0_0, %c0_1] : memref<1x4x48xf32, #tpu.memory_space<vmem>>, vector<1x4x48xf32>
    %1 = vector.extract_strided_slice %0 {offsets = [0, 0, 0], sizes = [1, 3, 48], strides = [1, 1, 1]} : vector<1x4x48xf32> to vector<1x3x48xf32>
    %2 = vector.extract_strided_slice %0 {offsets = [0, 1, 0], sizes = [1, 3, 12], strides = [1, 1, 1]} : vector<1x4x48xf32> to vector<1x3x12xf32>
    %3 = tpu.concatenate %1, %2 in 2 : vector<1x3x48xf32>, vector<1x3x12xf32> -> vector<1x3x60xf32>
    %4 = vector.shape_cast %3 : vector<1x3x60xf32> to vector<3x60xf32>
    %c0_2 = arith.constant 0 : index
    %c0_3 = arith.constant 0 : index
    %5 = vector.load %arg3[%c0_2, %c0_3] : memref<60x128xf32, #tpu.memory_space<vmem>>, vector<60x128xf32>
    %cst = arith.constant dense<0.000000e+00> : vector<3x128xf32>
    %6 = tpu.matmul %4, %5, %cst {dimension_numbers = #tpu.dot_dimension_numbers<[1], [0], [0], [1], [0, 0, 1, 1], [], []>} : vector<3x60xf32>, vector<60x128xf32>, vector<3x128xf32> -> vector<3x128xf32>
    %c0_4 = arith.constant 0 : index
    %c0_5 = arith.constant 0 : index
    %7 = vector.load %arg4[%c0_4, %c0_5] : memref<1x128xf32, #tpu.memory_space<vmem>>, vector<1x128xf32>
    %8 = vector.broadcast %7 : vector<1x128xf32> to vector<3x128xf32>
    %9 = arith.addf %6, %8 : vector<3x128xf32>
    %cst_6 = arith.constant 0.000000e+00 : f32
    %10 = vector.broadcast %cst_6 : f32 to vector<3x128xf32>
    %11 = arith.maximumf %9, %10 : vector<3x128xf32>
    %12 = vector.shape_cast %11 : vector<3x128xf32> to vector<1x3x128xf32>
    %13 = vector.extract_strided_slice %12 {offsets = [0, 0, 0], sizes = [1, 2, 128], strides = [1, 1, 1]} : vector<1x3x128xf32> to vector<1x2x128xf32>
    %14 = vector.extract_strided_slice %12 {offsets = [0, 1, 0], sizes = [1, 2, 128], strides = [1, 1, 1]} : vector<1x3x128xf32> to vector<1x2x128xf32>
    %15 = tpu.concatenate %13, %14 in 2 : vector<1x2x128xf32>, vector<1x2x128xf32> -> vector<1x2x256xf32>
    %16 = vector.shape_cast %15 : vector<1x2x256xf32> to vector<2x256xf32>
    %c0_7 = arith.constant 0 : index
    %c0_8 = arith.constant 0 : index
    %17 = vector.load %arg5[%c0_7, %c0_8] : memref<256x64xf32, #tpu.memory_space<vmem>>, vector<256x64xf32>
    %cst_9 = arith.constant dense<0.000000e+00> : vector<2x64xf32>
    %18 = tpu.matmul %16, %17, %cst_9 {dimension_numbers = #tpu.dot_dimension_numbers<[1], [0], [0], [1], [0, 0, 1, 1], [], []>} : vector<2x256xf32>, vector<256x64xf32>, vector<2x64xf32> -> vector<2x64xf32>
    %c0_10 = arith.constant 0 : index
    %c0_11 = arith.constant 0 : index
    %19 = vector.load %arg6[%c0_10, %c0_11] : memref<1x64xf32, #tpu.memory_space<vmem>>, vector<1x64xf32>
    %20 = vector.broadcast %19 : vector<1x64xf32> to vector<2x64xf32>
    %21 = arith.addf %18, %20 : vector<2x64xf32>
    %cst_12 = arith.constant 0.000000e+00 : f32
    %22 = vector.broadcast %cst_12 : f32 to vector<2x64xf32>
    %23 = arith.maximumf %21, %22 : vector<2x64xf32>
    %c0_13 = arith.constant 0 : index
    %c0_14 = arith.constant 0 : index
    %24 = vector.load %arg7[%c0_13, %c0_14] : memref<64x128xf32, #tpu.memory_space<vmem>>, vector<64x128xf32>
    %cst_15 = arith.constant dense<0.000000e+00> : vector<2x128xf32>
    %25 = tpu.matmul %23, %24, %cst_15 {dimension_numbers = #tpu.dot_dimension_numbers<[1], [0], [0], [1], [0, 0, 1, 1], [], []>} : vector<2x64xf32>, vector<64x128xf32>, vector<2x128xf32> -> vector<2x128xf32>
    %c0_16 = arith.constant 0 : index
    %c0_17 = arith.constant 0 : index
    %26 = vector.load %arg8[%c0_16, %c0_17] : memref<1x128xf32, #tpu.memory_space<vmem>>, vector<1x128xf32>
    %27 = vector.broadcast %26 : vector<1x128xf32> to vector<2x128xf32>
    %28 = arith.addf %25, %27 : vector<2x128xf32>
    %cst_18 = arith.constant 0.000000e+00 : f32
    %29 = vector.broadcast %cst_18 : f32 to vector<2x128xf32>
    %30 = arith.maximumf %28, %29 : vector<2x128xf32>
    %c0_19 = arith.constant 0 : index
    %c0_20 = arith.constant 0 : index
    %31 = vector.load %arg9[%c0_19, %c0_20] : memref<128x128xf32, #tpu.memory_space<vmem>>, vector<128x128xf32>
    %cst_21 = arith.constant dense<0.000000e+00> : vector<2x128xf32>
    %32 = tpu.matmul %30, %31, %cst_21 {dimension_numbers = #tpu.dot_dimension_numbers<[1], [0], [0], [1], [0, 0, 1, 1], [], []>} : vector<2x128xf32>, vector<128x128xf32>, vector<2x128xf32> -> vector<2x128xf32>
    %c0_22 = arith.constant 0 : index
    %c0_23 = arith.constant 0 : index
    %33 = vector.load %arg10[%c0_22, %c0_23] : memref<1x128xf32, #tpu.memory_space<vmem>>, vector<1x128xf32>
    %34 = vector.broadcast %33 : vector<1x128xf32> to vector<2x128xf32>
    %35 = arith.addf %32, %34 : vector<2x128xf32>
    %cst_24 = arith.constant 0.000000e+00 : f32
    %36 = vector.broadcast %cst_24 : f32 to vector<2x128xf32>
    %37 = arith.maximumf %35, %36 : vector<2x128xf32>
    %38 = vector.shape_cast %37 : vector<2x128xf32> to vector<1x2x128xf32>
    %c0_25 = arith.constant 0 : index
    %c0_26 = arith.constant 0 : index
    %c0_27 = arith.constant 0 : index
    %39 = vector.load %arg11[%c0_25, %c0_26, %c0_27] : memref<1x2x128xf32, #tpu.memory_space<vmem>>, vector<1x2x128xf32>
    tpu.vector_store %arg11[%c0_25, %c0_26, %c0_27], %38 {strides = array<i32>} : memref<1x2x128xf32, #tpu.memory_space<vmem>>, vector<1x2x128xf32>,
    return
  }
  func.func @transform_0(%arg0: i32, %arg1: memref<1xi32, #tpu.memory_space<smem>>) -> (i32, i32, i32) {
    %c0_i32 = arith.constant 0 : i32
    %c0_i32_0 = arith.constant 0 : i32
    %c0_i32_1 = arith.constant 0 : i32
    return %arg0, %c0_i32, %c0_i32_0 : i32, i32, i32
  }
  func.func @transform_1(%arg0: i32, %arg1: memref<1xi32, #tpu.memory_space<smem>>) -> (i32, i32) {
    %c0_i32 = arith.constant 0 : i32
    %c0_i32_0 = arith.constant 0 : i32
    %c0_i32_1 = arith.constant 0 : i32
    return %c0_i32, %c0_i32_0 : i32, i32
  }
  func.func @transform_2(%arg0: i32, %arg1: memref<1xi32, #tpu.memory_space<smem>>) -> (i32, i32) {
    %c0_i32 = arith.constant 0 : i32
    %c0_i32_0 = arith.constant 0 : i32
    %c0_i32_1 = arith.constant 0 : i32
    return %c0_i32, %c0_i32_0 : i32, i32
  }
  func.func @transform_3(%arg0: i32, %arg1: memref<1xi32, #tpu.memory_space<smem>>) -> (i32, i32) {
    %c0_i32 = arith.constant 0 : i32
    %c0_i32_0 = arith.constant 0 : i32
    %c0_i32_1 = arith.constant 0 : i32
    return %c0_i32, %c0_i32_0 : i32, i32
  }
  func.func @transform_4(%arg0: i32, %arg1: memref<1xi32, #tpu.memory_space<smem>>) -> (i32, i32) {
    %c0_i32 = arith.constant 0 : i32
    %c0_i32_0 = arith.constant 0 : i32
    %c0_i32_1 = arith.constant 0 : i32
    return %c0_i32, %c0_i32_0 : i32, i32
  }
  func.func @transform_5(%arg0: i32, %arg1: memref<1xi32, #tpu.memory_space<smem>>) -> (i32, i32) {
    %c0_i32 = arith.constant 0 : i32
    %c0_i32_0 = arith.constant 0 : i32
    %c0_i32_1 = arith.constant 0 : i32
    return %c0_i32, %c0_i32_0 : i32, i32
  }
  func.func @transform_6(%arg0: i32, %arg1: memref<1xi32, #tpu.memory_space<smem>>) -> (i32, i32) {
    %c0_i32 = arith.constant 0 : i32
    %c0_i32_0 = arith.constant 0 : i32
    %c0_i32_1 = arith.constant 0 : i32
    return %c0_i32, %c0_i32_0 : i32, i32
  }
  func.func @transform_7(%arg0: i32, %arg1: memref<1xi32, #tpu.memory_space<smem>>) -> (i32, i32) {
    %c0_i32 = arith.constant 0 : i32
    %c0_i32_0 = arith.constant 0 : i32
    %c0_i32_1 = arith.constant 0 : i32
    return %c0_i32, %c0_i32_0 : i32, i32
  }
  func.func @transform_8(%arg0: i32, %arg1: memref<1xi32, #tpu.memory_space<smem>>) -> (i32, i32) {
    %c0_i32 = arith.constant 0 : i32
    %c0_i32_0 = arith.constant 0 : i32
    %c0_i32_1 = arith.constant 0 : i32
    return %c0_i32, %c0_i32_0 : i32, i32
  }
  func.func @transform_9(%arg0: i32, %arg1: memref<1xi32, #tpu.memory_space<smem>>) -> (i32, i32, i32) {
    %c0_i32 = arith.constant 0 : i32
    %c0_i32_0 = arith.constant 0 : i32
    %c0_i32_1 = arith.constant 0 : i32
    return %arg0, %c0_i32, %c0_i32_0 : i32, i32, i32
  }
}

</mosaic_0001>

<llo_original>
// kernel: tpu_custom_call.1
$region0: #{tpu_custom_call.1}
  #allocation0 [shape = 'u32[]', space=smem, size = 0x4, offset = 0x4, fixed_abs, tag = 'smem constant byte address 0x4 - core index']
  #allocation1 [shape = 'u32[72,128]{1,0:T(1,128)}', space=vmem, size = 0x9000, scoped, tag = 'internal scratch']
  #allocation2 [shape = 's32[1]{0}', space=sflag, size = 0x4, scoped, tag = 'scoped memory for tpu_custom_call.1']
  #allocation3 [shape = 's32[1]{0:T(128)S(6)}', space=smem, size = 0x200, scoped, tag = 'prefetched SMEM operand 0']
  %s0 = inlined_call_operand.<no memory space> [shape: s32[1], index: 0, kind: input, shape index: {}]
  %s1 = inlined_call_operand.vmem [shape: f32[2,4,48], index: 1, kind: input, shape index: {}]
  %s2 = inlined_call_operand.vmem [shape: f32[60,128], index: 2, kind: input, shape index: {}]
  %s3 = inlined_call_operand.vmem [shape: f32[1,128], index: 3, kind: input, shape index: {}]
  %s4 = inlined_call_operand.vmem [shape: f32[256,64], index: 4, kind: input, shape index: {}]
  %s5 = inlined_call_operand.vmem [shape: f32[1,64], index: 5, kind: input, shape index: {}]
  %s6 = inlined_call_operand.vmem [shape: f32[64,128], index: 6, kind: input, shape index: {}]
  %s7 = inlined_call_operand.vmem [shape: f32[1,128], index: 7, kind: input, shape index: {}]
  %s8 = inlined_call_operand.vmem [shape: f32[128,128], index: 8, kind: input, shape index: {}]
  %s9 = inlined_call_operand.vmem [shape: f32[1,128], index: 9, kind: input, shape index: {}]
  %s10 = inlined_call_operand.hbm [shape: f32[2,2,128], index: 10, kind: output, shape index: {}]
  %s11 = sld [smem:[#allocation0]]
  $region69: #{tpu_custom_call.1} parent=0
    _
  %s13 = ssub.s32 1, %s11
  %s14 = scalar_select 0, %s13, %s11
  %15 = sst [smem:[#allocation3]] %s0
  $region1: #{tpu_custom_call.1} parent=0
    #allocation4 [shape = 'u8[2048]{0}', space=vmem, size = 0x800, scoped, tag = 'output window, operand 0']
    #allocation5 [shape = 's32[2]{0}', space=sflag, size = 0x8, scoped, tag = 'scoped memory for tpu_custom_call.1']
    %16 = vsyncpa [#allocation5], 0
    %s17 = scalar_lea.sflag [#allocation5], 1
    %18 = vsyncpa %s17, 0
    loop: start=0, step=1, limit=4
    $region2: #{tpu_custom_call.1} parent=1 // loop_pre_header
      _
    $region3: #{tpu_custom_call.1} parent=1 // loop_header
      %s20 = sphi 0, %s24
      %p21 = scmp.ge.s32.totalorder %s20, 4
      %s30 = sphi 0, %s32
      %s33 = sphi 0, %s30
      %s34 = sphi 0, %s33
      %s50 = sphi 0, %s34
      %s54 = sphi 0, %s54
      %s56 = sphi 0, %s54
      %s57 = sphi 0, %s56
      %s71 = sphi 0, %s57
      %s75 = sphi 0, %s75
      %s77 = sphi 0, %s75
      %s78 = sphi 0, %s77
      %s92 = sphi 0, %s78
      %s96 = sphi 0, %s96
      %s98 = sphi 0, %s96
      %s99 = sphi 0, %s98
      %s113 = sphi 0, %s99
      %s117 = sphi 0, %s117
      %s119 = sphi 0, %s117
      %s120 = sphi 0, %s119
      %s134 = sphi 0, %s120
      %s138 = sphi 0, %s138
      %s140 = sphi 0, %s138
      %s141 = sphi 0, %s140
      %s155 = sphi 0, %s141
      %s159 = sphi 0, %s159
      %s161 = sphi 0, %s159
      %s162 = sphi 0, %s161
      %s176 = sphi 0, %s162
      %s180 = sphi 0, %s180
      %s182 = sphi 0, %s180
      %s183 = sphi 0, %s182
      %s197 = sphi 0, %s183
      %s201 = sphi 0, %s201
      %s203 = sphi 0, %s201
      %s204 = sphi 0, %s203
      %s218 = sphi 0, %s204
      %s224 = sphi 0, %s226
      %s227 = sphi 0, %s224
      %s228 = sphi 0, %s227
      %s244 = sphi 0, %s228
    $region4: #{tpu_custom_call.1} parent=1 // loop_header_branch
      %23 = sbr.rel (%p21) target = $region8
    $region5: #{tpu_custom_call.1} parent=1 // loop_body
      %s25 = ssub.s32 %s20, 1
      %s26 = ssub.s32 %s20, 2
      %s27 = sadd.s32 %s20, 1
      %s28 = ssub.s32 %s20, %s27
      %p29 = scmp.eq.s32.totalorder %s28, 0
      %s31 = sadd.s32 %s30, 1
      %s32 = scalar_select %p29, %s30, %s31
      %p35 = pneg %p29
      %p36 = scmp.eq.s32.totalorder %s20, 1
      %p37 = por %p35, %p36
      %p38 = scmp.ne.s32.totalorder %s30, %s33
      %p39 = scmp.eq.s32.totalorder %s20, 0
      %p40 = por %p38, %p39
      %p41 = scmp.ne.s32.totalorder %s30, %s33
      %p42 = scmp.eq.s32.totalorder %s25, 1
      %p43 = por %p41, %p42
      %p44 = scmp.ne.s32.totalorder %s33, %s34
      %p45 = scmp.eq.s32.totalorder %s25, 0
      %p46 = por %p44, %p45
      %p47 = scmp.ne.s32.totalorder %s33, %s34
      %p48 = scmp.eq.s32.totalorder %s26, 1
      %p49 = por %p47, %p48
      %p51 = scmp.ne.s32.totalorder %s34, %s50
      %p52 = scmp.eq.s32.totalorder %s26, 0
      %p53 = por %p51, %p52
      %s55 = sadd.s32 %s54, 1
      %p58 = scmp.eq.s32.totalorder %s20, 1
      %p59 = scmp.ne.s32.totalorder %s54, %s56
      %p60 = scmp.eq.s32.totalorder %s20, 0
      %p61 = por %p59, %p60
      %p62 = scmp.ne.s32.totalorder %s54, %s56
      %p63 = scmp.eq.s32.totalorder %s25, 1
      %p64 = por %p62, %p63
      %p65 = scmp.ne.s32.totalorder %s56, %s57
      %p66 = scmp.eq.s32.totalorder %s25, 0
      %p67 = por %p65, %p66
      %p68 = scmp.ne.s32.totalorder %s56, %s57
      %p69 = scmp.eq.s32.totalorder %s26, 1
      %p70 = por %p68, %p69
      %p72 = scmp.ne.s32.totalorder %s57, %s71
      %p73 = scmp.eq.s32.totalorder %s26, 0
      %p74 = por %p72, %p73
      %s76 = sadd.s32 %s75, 1
      %p79 = scmp.eq.s32.totalorder %s20, 1
      %p80 = scmp.ne.s32.totalorder %s75, %s77
      %p81 = scmp.eq.s32.totalorder %s20, 0
      %p82 = por %p80, %p81
      %p83 = scmp.ne.s32.totalorder %s75, %s77
      %p84 = scmp.eq.s32.totalorder %s25, 1
      %p85 = por %p83, %p84
      %p86 = scmp.ne.s32.totalorder %s77, %s78
      %p87 = scmp.eq.s32.totalorder %s25, 0
      %p88 = por %p86, %p87
      %p89 = scmp.ne.s32.totalorder %s77, %s78
      %p90 = scmp.eq.s32.totalorder %s26, 1
      %p91 = por %p89, %p90
      %p93 = scmp.ne.s32.totalorder %s78, %s92
      %p94 = scmp.eq.s32.totalorder %s26, 0
      %p95 = por %p93, %p94
      %s97 = sadd.s32 %s96, 1
      %p100 = scmp.eq.s32.totalorder %s20, 1
      %p101 = scmp.ne.s32.totalorder %s96, %s98
      %p102 = scmp.eq.s32.totalorder %s20, 0
      %p103 = por %p101, %p102
      %p104 = scmp.ne.s32.totalorder %s96, %s98
      %p105 = scmp.eq.s32.totalorder %s25, 1
      %p106 = por %p104, %p105
      %p107 = scmp.ne.s32.totalorder %s98, %s99
      %p108 = scmp.eq.s32.totalorder %s25, 0
      %p109 = por %p107, %p108
      %p110 = scmp.ne.s32.totalorder %s98, %s99
      %p111 = scmp.eq.s32.totalorder %s26, 1
      %p112 = por %p110, %p111
      %p114 = scmp.ne.s32.totalorder %s99, %s113
      %p115 = scmp.eq.s32.totalorder %s26, 0
      %p116 = por %p114, %p115
      %s118 = sadd.s32 %s117, 1
      %p121 = scmp.eq.s32.totalorder %s20, 1
      %p122 = scmp.ne.s32.totalorder %s117, %s119
      %p123 = scmp.eq.s32.totalorder %s20, 0
      %p124 = por %p122, %p123
      %p125 = scmp.ne.s32.totalorder %s117, %s119
      %p126 = scmp.eq.s32.totalorder %s25, 1
      %p127 = por %p125, %p126
      %p128 = scmp.ne.s32.totalorder %s119, %s120
      %p129 = scmp.eq.s32.totalorder %s25, 0
      %p130 = por %p128, %p129
      %p131 = scmp.ne.s32.totalorder %s119, %s120
      %p132 = scmp.eq.s32.totalorder %s26, 1
      %p133 = por %p131, %p132
      %p135 = scmp.ne.s32.totalorder %s120, %s134
      %p136 = scmp.eq.s32.totalorder %s26, 0
      %p137 = por %p135, %p136
      %s139 = sadd.s32 %s138, 1
      %p142 = scmp.eq.s32.totalorder %s20, 1
      %p143 = scmp.ne.s32.totalorder %s138, %s140
      %p144 = scmp.eq.s32.totalorder %s20, 0
      %p145 = por %p143, %p144
      %p146 = scmp.ne.s32.totalorder %s138, %s140
      %p147 = scmp.eq.s32.totalorder %s25, 1
      %p148 = por %p146, %p147
      %p149 = scmp.ne.s32.totalorder %s140, %s141
      %p150 = scmp.eq.s32.totalorder %s25, 0
      %p151 = por %p149, %p150
      %p152 = scmp.ne.s32.totalorder %s140, %s141
      %p153 = scmp.eq.s32.totalorder %s26, 1
      %p154 = por %p152, %p153
      %p156 = scmp.ne.s32.totalorder %s141, %s155
      %p157 = scmp.eq.s32.totalorder %s26, 0
      %p158 = por %p156, %p157
      %s160 = sadd.s32 %s159, 1
      %p163 = scmp.eq.s32.totalorder %s20, 1
      %p164 = scmp.ne.s32.totalorder %s159, %s161
      %p165 = scmp.eq.s32.totalorder %s20, 0
      %p166 = por %p164, %p165
      %p167 = scmp.ne.s32.totalorder %s159, %s161
      %p168 = scmp.eq.s32.totalorder %s25, 1
      %p169 = por %p167, %p168
      %p170 = scmp.ne.s32.totalorder %s161, %s162
      %p171 = scmp.eq.s32.totalorder %s25, 0
      %p172 = por %p170, %p171
      %p173 = scmp.ne.s32.totalorder %s161, %s162
      %p174 = scmp.eq.s32.totalorder %s26, 1
      %p175 = por %p173, %p174
      %p177 = scmp.ne.s32.totalorder %s162, %s176
      %p178 = scmp.eq.s32.totalorder %s26, 0
      %p179 = por %p177, %p178
      %s181 = sadd.s32 %s180, 1
      %p184 = scmp.eq.s32.totalorder %s20, 1
      %p185 = scmp.ne.s32.totalorder %s180, %s182
      %p186 = scmp.eq.s32.totalorder %s20, 0
      %p187 = por %p185, %p186
      %p188 = scmp.ne.s32.totalorder %s180, %s182
      %p189 = scmp.eq.s32.totalorder %s25, 1
      %p190 = por %p188, %p189
      %p191 = scmp.ne.s32.totalorder %s182, %s183
      %p192 = scmp.eq.s32.totalorder %s25, 0
      %p193 = por %p191, %p192
      %p194 = scmp.ne.s32.totalorder %s182, %s183
      %p195 = scmp.eq.s32.totalorder %s26, 1
      %p196 = por %p194, %p195
      %p198 = scmp.ne.s32.totalorder %s183, %s197
      %p199 = scmp.eq.s32.totalorder %s26, 0
      %p200 = por %p198, %p199
      %s202 = sadd.s32 %s201, 1
      %p205 = scmp.eq.s32.totalorder %s20, 1
      %p206 = scmp.ne.s32.totalorder %s201, %s203
      %p207 = scmp.eq.s32.totalorder %s20, 0
      %p208 = por %p206, %p207
      %p209 = scmp.ne.s32.totalorder %s201, %s203
      %p210 = scmp.eq.s32.totalorder %s25, 1
      %p211 = por %p209, %p210
      %p212 = scmp.ne.s32.totalorder %s203, %s204
      %p213 = scmp.eq.s32.totalorder %s25, 0
      %p214 = por %p212, %p213
      %p215 = scmp.ne.s32.totalorder %s203, %s204
      %p216 = scmp.eq.s32.totalorder %s26, 1
      %p217 = por %p215, %p216
      %p219 = scmp.ne.s32.totalorder %s204, %s218
      %p220 = scmp.eq.s32.totalorder %s26, 0
      %p221 = por %p219, %p220
      %s222 = ssub.s32 %s20, %s27
      %p223 = scmp.eq.s32.totalorder %s222, 0
      %s225 = sadd.s32 %s224, 1
      %s226 = scalar_select %p223, %s224, %s225
      %p229 = pneg %p223
      %p230 = scmp.eq.s32.totalorder %s20, 1
      %p231 = por %p229, %p230
      %p232 = scmp.ne.s32.totalorder %s224, %s227
      %p233 = scmp.eq.s32.totalorder %s20, 0
      %p234 = por %p232, %p233
      %p235 = scmp.ne.s32.totalorder %s224, %s227
      %p236 = scmp.eq.s32.totalorder %s25, 1
      %p237 = por %p235, %p236
      %p238 = scmp.ne.s32.totalorder %s227, %s228
      %p239 = scmp.eq.s32.totalorder %s25, 0
      %p240 = por %p238, %p239
      %p241 = scmp.ne.s32.totalorder %s227, %s228
      %p242 = scmp.eq.s32.totalorder %s26, 1
      %p243 = por %p241, %p242
      %p245 = scmp.ne.s32.totalorder %s228, %s244
      %p246 = scmp.eq.s32.totalorder %s26, 0
      %p247 = por %p245, %p246
      %p248 = scmp.le.s32.totalorder 1, %s20
      %p249 = scmp.lt.s32.totalorder %s20, 3
      %p250 = pnand %p248, %p249
      %p251 = pneg %p250
      // Predicated region
      $region9: #{tpu_custom_call.1} parent=5 // pred_check
        _
      $region10: #{tpu_custom_call.1} parent=5 // pred_check_branch
        %253 = sbr.rel (%p250) target = $region12
      $region11: #{tpu_custom_call.1} parent=5 // pred_region
        %s254 = ssub.s32 %s20, 1
        // Predicated region
        $region13: #{tpu_custom_call.1} parent=11 // pred_check
          %p255 = pneg %p67
        $region14: #{tpu_custom_call.1} parent=11 // pred_check_branch
          %257 = sbr.rel (%p255) target = $region16
        $region15: #{tpu_custom_call.1} parent=11 // pred_region
          _
        $region16: #{tpu_custom_call.1} parent=11 // pred_fallthru
          _
        // Predicated region
        $region17: #{tpu_custom_call.1} parent=11 // pred_check
          %p258 = pneg %p88
        $region18: #{tpu_custom_call.1} parent=11 // pred_check_branch
          %260 = sbr.rel (%p258) target = $region20
        $region19: #{tpu_custom_call.1} parent=11 // pred_region
          _
        $region20: #{tpu_custom_call.1} parent=11 // pred_fallthru
          _
        // Predicated region
        $region21: #{tpu_custom_call.1} parent=11 // pred_check
          %p261 = pneg %p109
        $region22: #{tpu_custom_call.1} parent=11 // pred_check_branch
          %263 = sbr.rel (%p261) target = $region24
        $region23: #{tpu_custom_call.1} parent=11 // pred_region
          _
        $region24: #{tpu_custom_call.1} parent=11 // pred_fallthru
          _
        // Predicated region
        $region25: #{tpu_custom_call.1} parent=11 // pred_check
          %p264 = pneg %p130
        $region26: #{tpu_custom_call.1} parent=11 // pred_check_branch
          %266 = sbr.rel (%p264) target = $region28
        $region27: #{tpu_custom_call.1} parent=11 // pred_region
          _
        $region28: #{tpu_custom_call.1} parent=11 // pred_fallthru
          _
        // Predicated region
        $region29: #{tpu_custom_call.1} parent=11 // pred_check
          %p267 = pneg %p151
        $region30: #{tpu_custom_call.1} parent=11 // pred_check_branch
          %269 = sbr.rel (%p267) target = $region32
        $region31: #{tpu_custom_call.1} parent=11 // pred_region
          _
        $region32: #{tpu_custom_call.1} parent=11 // pred_fallthru
          _
        // Predicated region
        $region33: #{tpu_custom_call.1} parent=11 // pred_check
          %p270 = pneg %p172
        $region34: #{tpu_custom_call.1} parent=11 // pred_check_branch
          %272 = sbr.rel (%p270) target = $region36
        $region35: #{tpu_custom_call.1} parent=11 // pred_region
          _
        $region36: #{tpu_custom_call.1} parent=11 // pred_fallthru
          _
        // Predicated region
        $region37: #{tpu_custom_call.1} parent=11 // pred_check
          %p273 = pneg %p193
        $region38: #{tpu_custom_call.1} parent=11 // pred_check_branch
          %275 = sbr.rel (%p273) target = $region40
        $region39: #{tpu_custom_call.1} parent=11 // pred_region
          _
        $region40: #{tpu_custom_call.1} parent=11 // pred_fallthru
          _
        // Predicated region
        $region41: #{tpu_custom_call.1} parent=11 // pred_check
          %p276 = pneg %p214
        $region42: #{tpu_custom_call.1} parent=11 // pred_check_branch
          %278 = sbr.rel (%p276) target = $region44
        $region43: #{tpu_custom_call.1} parent=11 // pred_region
          _
        $region44: #{tpu_custom_call.1} parent=11 // pred_fallthru
          _
      $region12: #{tpu_custom_call.1} parent=5 // pred_fallthru
        _
      %p279 = scmp.lt.s32.totalorder %s20, 2
      // Predicated region
      $region45: #{tpu_custom_call.1} parent=5 // pred_check
        %p280 = pneg %p279
      $region46: #{tpu_custom_call.1} parent=5 // pred_check_branch
        %282 = sbr.rel (%p280) target = $region48
      $region47: #{tpu_custom_call.1} parent=5 // pred_region
        // Predicated region
        $region49: #{tpu_custom_call.1} parent=47 // pred_check
          %p283 = pneg %p40
        $region50: #{tpu_custom_call.1} parent=47 // pred_check_branch
          %285 = sbr.rel (%p283) target = $region52
        $region51: #{tpu_custom_call.1} parent=47 // pred_region
          %p286 = scmp.lt.s32.totalorder %s20, 1
          %s287 = scalar_select %p286, %s20, 1
          %s288 = smul.addr %s287, 4
          %s289 = scalar_lea.vmem %s1, %s288
        $region52: #{tpu_custom_call.1} parent=47 // pred_fallthru
          _
      $region48: #{tpu_custom_call.1} parent=5 // pred_fallthru
        _
      %p290 = scmp.le.s32.totalorder 1, %s20
      %p291 = scmp.lt.s32.totalorder %s20, 3
      %p292 = pnand %p290, %p291
      %p293 = pneg %p292
      // Predicated region
      $region53: #{tpu_custom_call.1} parent=5 // pred_check
        _
      $region54: #{tpu_custom_call.1} parent=5 // pred_check_branch
        %295 = sbr.rel (%p292) target = $region56
      $region55: #{tpu_custom_call.1} parent=5 // pred_region
        %s296 = ssub.s32 %s20, 1
        %p297 = scmp.lt.s32.totalorder %s25, 1
        %s298 = scalar_select %p297, %s25, 1
        %s299 = smul.addr %s298, 4
        %s300 = scalar_lea.vmem %s1, %s299
        %p301 = pneg %p46
        %p302 = pneg %p43
        %p303 = pneg %p67
        %p304 = pneg %p64
        %p305 = pneg %p88
        %p306 = pneg %p85
        %p307 = pneg %p109
        %p308 = pneg %p106
        %p309 = pneg %p130
        %p310 = pneg %p127
        %p311 = pneg %p151
        %p312 = pneg %p148
        %p313 = pneg %p172
        %p314 = pneg %p169
        %p315 = pneg %p193
        %p316 = pneg %p190
        %p317 = pneg %p214
        %p318 = pneg %p211
        %p319 = pneg %p240
        %p320 = pneg %p237
        %s321 = sand.u32 %s227, 1
        %s322 = scalar_lea.sflag [#allocation5], %s321
        %s323 = sand.u32 %s227, 1
        %s324 = smul.addr %s323, 2
        %s325 = scalar_lea.vmem [#allocation4], %s324
        %p326 = scmp.lt.s32.totalorder %s25, 1
        %s327 = scalar_select %p326, %s25, 1
        %s328 = smul.addr %s327, 4
        %s329 = scalar_lea.vmem %s1, %s328
        %v330 = vld [vmem:[%s329] sm:$0xf]
        %v332 = vrot.slane %v330, 1
        %333 = vrot.lane.b32.xlu0 %v332, 48
        %v334 = vpop.permute.xlu0 %333
        %vm336 = vcmask 392192
        %v337 = vsel %vm336, %v330, %v334
        %v338 = vld [vmem:[%s2] sm:$0xff]
        %v339 = vld [vmem:[%s2 + $0x8] sm:$0xff]
        %v340 = vld [vmem:[%s2 + $0x10] sm:$0xff]
        %v341 = vld [vmem:[%s2 + $0x18] sm:$0xff]
        %v342 = vld [vmem:[%s2 + $0x20] sm:$0xff]
        %v343 = vld [vmem:[%s2 + $0x28] sm:$0xff]
        %v344 = vld [vmem:[%s2 + $0x30] sm:$0xff]
        %v345 = vld [vmem:[%s2 + $0x38] sm:$0xf]
        %v346 = vld [vmem:[%s3] sm:$0x1]
        %v348 = vperm.slane %v346, 0
        %vm350 = vcmask 490496
        %v352 = vsel %vm350, %v337, 0
        %vm354 = vcmask 1043456
        %v356 = vsel %vm354, %v345, 0
        %358 = vmatpush.msra.mxu0 0.0
        %359 = vmatpush.msra.mxu0 0.0
        %360 = vmatpush.msra.mxu0 0.0
        %361 = vmatpush.msra.mxu0 0.0
        %362 = vmatpush.msra.mxu0 0.0
        %363 = vmatpush.msra.mxu0 0.0
        %364 = vmatpush.msra.mxu0 0.0
        %365 = vmatpush.msra.mxu0 0.0
        %366 = vmatpush.msra.mxu0 %v356
        %367 = vmatpush.msra.mxu0 %v344
        %368 = vmatpush.msra.mxu0 %v343
        %369 = vmatpush.msra.mxu0 %v342
        %370 = vmatpush.msra.mxu0 %v341
        %371 = vmatpush.msra.mxu0 %v340
        %372 = vmatpush.msra.mxu0 %v339
        %373 = vmatpush.msra.mxu0 %v338
        %374 = vmatmul.f32.gmra.mxu0 %v352
        %v375 = vpop.f32.mrf.mxu0
        %v376 = vadd.f32 %v348, %v375
        %377 = vdwg.mxu0
        %v378 = vmax.f32 %v376, 0.0
        %v380 = vrot.slane %v378, 1
        %v382 = vld [vmem:[%s4] sm:$0xff]
        %v383 = vld [vmem:[%s4 + $0x8] sm:$0xff]
        %v384 = vld [vmem:[%s4 + $0x10] sm:$0xff]
        %v385 = vld [vmem:[%s4 + $0x18] sm:$0xff]
        %v386 = vld [vmem:[%s4 + $0x20] sm:$0xff]
        %v387 = vld [vmem:[%s4 + $0x28] sm:$0xff]
        %v388 = vld [vmem:[%s4 + $0x30] sm:$0xff]
        %v389 = vld [vmem:[%s4 + $0x38] sm:$0xff]
        %v390 = vld [vmem:[%s4 + $0x40] sm:$0xff]
        %v391 = vld [vmem:[%s4 + $0x48] sm:$0xff]
        %v392 = vld [vmem:[%s4 + $0x50] sm:$0xff]
        %v393 = vld [vmem:[%s4 + $0x58] sm:$0xff]
        %v394 = vld [vmem:[%s4 + $0x60] sm:$0xff]
        %v395 = vld [vmem:[%s4 + $0x68] sm:$0xff]
        %v396 = vld [vmem:[%s4 + $0x70] sm:$0xff]
        %v397 = vld [vmem:[%s4 + $0x78] sm:$0xff]
        %v398 = vld [vmem:[%s4 + $0x80] sm:$0xff]
        %v399 = vld [vmem:[%s4 + $0x88] sm:$0xff]
        %v400 = vld [vmem:[%s4 + $0x90] sm:$0xff]
        %v401 = vld [vmem:[%s4 + $0x98] sm:$0xff]
        %v402 = vld [vmem:[%s4 + $0xa0] sm:$0xff]
        %v403 = vld [vmem:[%s4 + $0xa8] sm:$0xff]
        %v404 = vld [vmem:[%s4 + $0xb0] sm:$0xff]
        %v405 = vld [vmem:[%s4 + $0xb8] sm:$0xff]
        %v406 = vld [vmem:[%s4 + $0xc0] sm:$0xff]
        %v407 = vld [vmem:[%s4 + $0xc8] sm:$0xff]
        %v408 = vld [vmem:[%s4 + $0xd0] sm:$0xff]
        %v409 = vld [vmem:[%s4 + $0xd8] sm:$0xff]
        %v410 = vld [vmem:[%s4 + $0xe0] sm:$0xff]
        %v411 = vld [vmem:[%s4 + $0xe8] sm:$0xff]
        %v412 = vld [vmem:[%s4 + $0xf0] sm:$0xff]
        %v413 = vld [vmem:[%s4 + $0xf8] sm:$0xff]
        %v414 = vld [vmem:[%s5] sm:$0x1]
        %v416 = vperm.slane %v414, 0
        %418 = vmatpush.msra.mxu0 %v397
        %419 = vmatpush.msra.mxu0 %v396
        %420 = vmatpush.msra.mxu0 %v395
        %421 = vmatpush.msra.mxu0 %v394
        %422 = vmatpush.msra.mxu0 %v393
        %423 = vmatpush.msra.mxu0 %v392
        %424 = vmatpush.msra.mxu0 %v391
        %425 = vmatpush.msra.mxu0 %v390
        %426 = vmatpush.msra.mxu0 %v389
        %427 = vmatpush.msra.mxu0 %v388
        %428 = vmatpush.msra.mxu0 %v387
        %429 = vmatpush.msra.mxu0 %v386
        %430 = vmatpush.msra.mxu0 %v385
        %431 = vmatpush.msra.mxu0 %v384
        %432 = vmatpush.msra.mxu0 %v383
        %433 = vmatpush.msra.mxu0 %v382
        %434 = vmatmul.f32.gmra.mxu0 %v378
        %v435 = vpop.f32.mrf.mxu0
        %v436 = vadd.f32 %v416, %v435
        %437 = vdwg.mxu0
        %438 = vmatpush.msra.mxu0 %v413
        %439 = vmatpush.msra.mxu0 %v412
        %440 = vmatpush.msra.mxu0 %v411
        %441 = vmatpush.msra.mxu0 %v410
        %442 = vmatpush.msra.mxu0 %v409
        %443 = vmatpush.msra.mxu0 %v408
        %444 = vmatpush.msra.mxu0 %v407
        %445 = vmatpush.msra.mxu0 %v406
        %446 = vmatpush.msra.mxu0 %v405
        %447 = vmatpush.msra.mxu0 %v404
        %448 = vmatpush.msra.mxu0 %v403
        %449 = vmatpush.msra.mxu0 %v402
        %450 = vmatpush.msra.mxu0 %v401
        %451 = vmatpush.msra.mxu0 %v400
        %452 = vmatpush.msra.mxu0 %v399
        %453 = vmatpush.msra.mxu0 %v398
        %454 = vmatmul.f32.gmra.mxu0 %v380
        %v455 = vpop.f32.mrf.mxu0
        %v456 = vadd.f32 %v436, %v455
        %457 = vdwg.mxu0
        %v458 = vmax.f32 %v456, 0.0
        %v459 = vld [vmem:[%s6] sm:$0xff]
        %v460 = vld [vmem:[%s6 + $0x8] sm:$0xff]
        %v461 = vld [vmem:[%s6 + $0x10] sm:$0xff]
        %v462 = vld [vmem:[%s6 + $0x18] sm:$0xff]
        %v463 = vld [vmem:[%s6 + $0x20] sm:$0xff]
        %v464 = vld [vmem:[%s6 + $0x28] sm:$0xff]
        %v465 = vld [vmem:[%s6 + $0x30] sm:$0xff]
        %v466 = vld [vmem:[%s6 + $0x38] sm:$0xff]
        %v467 = vld [vmem:[%s7] sm:$0x1]
        %v469 = vperm.slane %v467, 0
        %vm471 = vcmask 523264
        %v473 = vsel %vm471, %v458, 0
        %475 = vmatpush.msra.mxu0 0.0
        %476 = vmatpush.msra.mxu0 0.0
        %477 = vmatpush.msra.mxu0 0.0
        %478 = vmatpush.msra.mxu0 0.0
        %479 = vmatpush.msra.mxu0 0.0
        %480 = vmatpush.msra.mxu0 0.0
        %481 = vmatpush.msra.mxu0 0.0
        %482 = vmatpush.msra.mxu0 0.0
        %483 = vmatpush.msra.mxu0 %v466
        %484 = vmatpush.msra.mxu0 %v465
        %485 = vmatpush.msra.mxu0 %v464
        %486 = vmatpush.msra.mxu0 %v463
        %487 = vmatpush.msra.mxu0 %v462
        %488 = vmatpush.msra.mxu0 %v461
        %489 = vmatpush.msra.mxu0 %v460
        %490 = vmatpush.msra.mxu0 %v459
        %491 = vmatmul.f32.gmra.mxu0 %v473
        %v492 = vpop.f32.mrf.mxu0
        %v493 = vadd.f32 %v469, %v492
        %494 = vdwg.mxu0
        %v495 = vmax.f32 %v493, 0.0
        %v496 = vld [vmem:[%s8] sm:$0xff]
        %v497 = vld [vmem:[%s8 + $0x8] sm:$0xff]
        %v498 = vld [vmem:[%s8 + $0x10] sm:$0xff]
        %v499 = vld [vmem:[%s8 + $0x18] sm:$0xff]
        %v500 = vld [vmem:[%s8 + $0x20] sm:$0xff]
        %v501 = vld [vmem:[%s8 + $0x28] sm:$0xff]
        %v502 = vld [vmem:[%s8 + $0x30] sm:$0xff]
        %v503 = vld [vmem:[%s8 + $0x38] sm:$0xff]
        %v504 = vld [vmem:[%s8 + $0x40] sm:$0xff]
        %v505 = vld [vmem:[%s8 + $0x48] sm:$0xff]
        %v506 = vld [vmem:[%s8 + $0x50] sm:$0xff]
        %v507 = vld [vmem:[%s8 + $0x58] sm:$0xff]
        %v508 = vld [vmem:[%s8 + $0x60] sm:$0xff]
        %v509 = vld [vmem:[%s8 + $0x68] sm:$0xff]
        %v510 = vld [vmem:[%s8 + $0x70] sm:$0xff]
        %v511 = vld [vmem:[%s8 + $0x78] sm:$0xff]
        %v512 = vld [vmem:[%s9] sm:$0x1]
        %v514 = vperm.slane %v512, 0
        %516 = vmatpush.msra.mxu0 %v511
        %517 = vmatpush.msra.mxu0 %v510
        %518 = vmatpush.msra.mxu0 %v509
        %519 = vmatpush.msra.mxu0 %v508
        %520 = vmatpush.msra.mxu0 %v507
        %521 = vmatpush.msra.mxu0 %v506
        %522 = vmatpush.msra.mxu0 %v505
        %523 = vmatpush.msra.mxu0 %v504
        %524 = vmatpush.msra.mxu0 %v503
        %525 = vmatpush.msra.mxu0 %v502
        %526 = vmatpush.msra.mxu0 %v501
        %527 = vmatpush.msra.mxu0 %v500
        %528 = vmatpush.msra.mxu0 %v499
        %529 = vmatpush.msra.mxu0 %v498
        %530 = vmatpush.msra.mxu0 %v497
        %531 = vmatpush.msra.mxu0 %v496
        %532 = vmatmul.f32.gmra.mxu0 %v495
        %v533 = vpop.f32.mrf.mxu0
        %v534 = vadd.f32 %v514, %v533
        %535 = vdwg.mxu0
        %v536 = vmax.f32 %v534, 0.0
        %537 = vst [vmem:[%s325] sm:$0x3] %v536
        %s538 = sand.u32 %s227, 1
        %s539 = scalar_lea.sflag [#allocation5], %s538
        %s540 = sand.u32 %s227, 1
        %s541 = smul.addr %s540, 2
        %s542 = scalar_lea.vmem [#allocation4], %s541
        // Predicated region
        $region57: #{tpu_custom_call.1} parent=55 // pred_check
          %p543 = pneg %p237
        $region58: #{tpu_custom_call.1} parent=55 // pred_check_branch
          %545 = sbr.rel (%p543) target = $region60
        $region59: #{tpu_custom_call.1} parent=55 // pred_region
          %547 = vsyncadd %s539, 0
          %s548 = smul.addr %s25, 2
          %s549 = scalar_lea.hbm %s10, %s548
          %s551 = sshll.u32 %s542, 4
          %s552 = int_to_ptr.vmem [resolvable:$true] %s551
          %s553 = sshll.u32 %s549, 4
          %s554 = int_to_ptr.hbm [resolvable:$true] %s553
          %556 = dma.vmem_to_hbm [thread:$0]  %s552, 32, %s554, %s539
        $region60: #{tpu_custom_call.1} parent=55 // pred_fallthru
          _
      $region56: #{tpu_custom_call.1} parent=5 // pred_fallthru
        _
      %p557 = scmp.le.s32.totalorder 2, %s20
      // Predicated region
      $region61: #{tpu_custom_call.1} parent=5 // pred_check
        %p558 = pneg %p557
      $region62: #{tpu_custom_call.1} parent=5 // pred_check_branch
        %560 = sbr.rel (%p558) target = $region64
      $region63: #{tpu_custom_call.1} parent=5 // pred_region
        %s561 = ssub.s32 %s20, 2
        // Predicated region
        $region65: #{tpu_custom_call.1} parent=63 // pred_check
          %p562 = pneg %p243
        $region66: #{tpu_custom_call.1} parent=63 // pred_check_branch
          %564 = sbr.rel (%p562) target = $region68
        $region67: #{tpu_custom_call.1} parent=63 // pred_region
          %s565 = sand.u32 %s228, 1
          %s566 = scalar_lea.sflag [#allocation5], %s565
          %s567 = sand.u32 %s228, 1
          %s568 = smul.addr %s567, 2
          %s569 = scalar_lea.vmem [#allocation4], %s568
          %571 = dma.done %s566, 32
        $region68: #{tpu_custom_call.1} parent=63 // pred_fallthru
          _
      $region64: #{tpu_custom_call.1} parent=5 // pred_fallthru
        _
    $region6: #{tpu_custom_call.1} parent=1 // loop_footer
      %s24 = sadd.s32 1, %s20
    $region7: #{tpu_custom_call.1} parent=1 // loop_footer_branch
      %19 = sbr.rel target = $region3
    $region8: #{tpu_custom_call.1} parent=1 // loop_exit
      _
    %572 = vsyncpa [#allocation5], 1
    %s573 = scalar_lea.sflag [#allocation5], 1
    %574 = vsyncpa %s573, 1

</llo_original>
